<compile_context>
chip_gen: v7x
topology: tpu7x:2x2x1
jax: 0.10.0
libtpu: 0.0.40
codegen_flags: <defaults>
</compile_context>

<pallas_src>
import jax
import jax.numpy as jnp
from jax import lax
from jax.experimental import pallas as pl
from jax.experimental.pallas import tpu as pltpu
import numpy as np

# ---- architecture sizes (mirror Conv1dLayerSizes / FullyConnectedLayerSizes) ----
SIGNAL_LEN = 32
K = 5
C1 = 6
C2 = 15
L1 = SIGNAL_LEN - K + 1          # conv1 "valid" output length = 28
LP1 = L1 // 2                    # after MaxPool1d(2) -> 14
L2 = LP1 - K + 1                 # conv2 output length = 10
LP2 = L2 // 2                    # after MaxPool1d(2) -> 5
FC1_IN = C2 * LP2                # 75
FC1_OUT = round(0.7 * FC1_IN)    # 52   (Python round, same as the torch code)
FC2_OUT = round(0.5 * FC1_OUT)   # 26
FC3_OUT = 1
NQ = SIGNAL_LEN // 4             # 8 groups of 4 samples (conv1 phase decomposition)

# ---- single packed parameter slab (one DMA); all section starts 8-row aligned ----
W1_ROW = 0                       # rows 0..4    : w1t (K, C1),   w1t[k,c] = w1[c,0,k]
B1_ROW = 8                       # row 8        : b1  (C1,)
B2_ROW = 16                      # row 16       : b2  (C2,)
W2_ROW = 24                      # rows 24..53  : w2 im2col (K*C1, C2)
WF1_ROW = 56                     # rows 56..130 : wf1 (FC1_IN, FC1_OUT), l-major rows
WF2_ROW = 136                    # rows 136..187: wf2 (FC1_OUT, FC2_OUT)
WF3_ROW = 192                    # rows 192..217: wf3 (FC2_OUT, 1)
BF1_ROW = 224
BF2_ROW = 232
BF3_ROW = 240
P_ROWS = 248
P_LANES = 128


def discriminator_kernel(x_ref, p_ref, out_ref):
    B = out_ref.shape[0]
    nb5 = LP2 * B                                            # 5*B rows per pool half

    # ---- parameters: static contiguous slices of the packed slab ----
    w1t = p_ref[W1_ROW:W1_ROW + K, 0:C1]                     # (K, C1)
    w1k = [w1t[k:k + 1, :] for k in range(K)]                # K x (1, C1)
    b1 = p_ref[B1_ROW:B1_ROW + 1, 0:C1]                      # (1, C1)
    b2 = p_ref[B2_ROW:B2_ROW + 1, 0:C2]                      # (1, C2)
    w2 = p_ref[W2_ROW:W2_ROW + K * C1, 0:C2]                 # (K*C1, C2)
    wf1 = p_ref[WF1_ROW:WF1_ROW + FC1_IN, 0:FC1_OUT]
    bf1 = p_ref[BF1_ROW:BF1_ROW + 1, 0:FC1_OUT]
    wf2 = p_ref[WF2_ROW:WF2_ROW + FC1_OUT, 0:FC2_OUT]
    bf2 = p_ref[BF2_ROW:BF2_ROW + 1, 0:FC2_OUT]
    wf3 = p_ref[WF3_ROW:WF3_ROW + FC2_OUT, 0:FC3_OUT]
    bf3 = p_ref[BF3_ROW:BF3_ROW + 1, 0:FC3_OUT]

    # ---- conv1 + ReLU + MaxPool1d(2), batch-vectorized on the VPU ----
    # x_ref holds xq[q*B + b, r] = x[b, 4q + r]: four phase streams in the lanes,
    # batch packed inside the sublane index so window shifts are contiguous slices.
    xv = x_ref[...]                                          # (8B, 4)
    c = [xv[:, r:r + 1] for r in range(4)]                   # 4 x (8B, 1)
    ca = [cc[0:(NQ - 1) * B, :] for cc in c]                 # group q   (j = 0..6)
    cb = [cc[B:NQ * B, :] for cc in c]                       # group q+1 (j = 0..6)

    # conv1 (pre-bias) at positions 4j+d, d = 0..3; rows indexed j*B + b.
    t0 = ca[0]*w1k[0] + ca[1]*w1k[1] + ca[2]*w1k[2] + ca[3]*w1k[3] + cb[0]*w1k[4]
    t1 = ca[1]*w1k[0] + ca[2]*w1k[1] + ca[3]*w1k[2] + cb[0]*w1k[3] + cb[1]*w1k[4]
    t2 = ca[2]*w1k[0] + ca[3]*w1k[1] + cb[0]*w1k[2] + cb[1]*w1k[3] + cb[2]*w1k[4]
    t3 = ca[3]*w1k[0] + cb[0]*w1k[1] + cb[1]*w1k[2] + cb[2]*w1k[3] + cb[3]*w1k[4]

    # relu(max(a,b) + bias) == maxpool(relu(conv + bias)) over a pool pair.
    es = jnp.maximum(jnp.maximum(t0, t1) + b1, 0.0)          # (7B, C1): pool1 at pos 2j
    osq = jnp.maximum(jnp.maximum(t2, t3) + b1, 0.0)         # (7B, C1): pool1 at pos 2j+1

    # ---- conv2 im2col: one (10B, K*C1) matrix for the whole batch ----
    # Top half = even conv2 positions t=2s, bottom half = odd t=2s+1; rows s*B + b.
    m_blocks = [
        jnp.concatenate([es[0:nb5], osq[0:nb5]], axis=0),                        # k=0
        jnp.concatenate([osq[0:nb5], es[B:B + nb5]], axis=0),                    # k=1
        jnp.concatenate([es[B:B + nb5], osq[B:B + nb5]], axis=0),                # k=2
        jnp.concatenate([osq[B:B + nb5], es[2 * B:2 * B + nb5]], axis=0),        # k=3
        jnp.concatenate([es[2 * B:2 * B + nb5], osq[2 * B:2 * B + nb5]], axis=0),# k=4
    ]
    m2 = jnp.concatenate(m_blocks, axis=1)                   # (10B, K*C1)

    # conv2 + bias + ReLU: single MXU matmul for the whole batch.
    s2 = jnp.maximum(jnp.dot(m2, w2, preferred_element_type=jnp.float32) + b2, 0.0)

    # ---- MaxPool1d(2) of conv2 + torch-order flatten (via packed wf1) ----
    pooled = jnp.maximum(s2[0:nb5], s2[nb5:2 * nb5])         # (5B, C2), row s*B + b
    h = jnp.concatenate([pooled[s * B:(s + 1) * B, :] for s in range(LP2)],
                        axis=1)                              # (B, FC1_IN), l-major

    # ---- FC stack batched across B: one matmul per layer ----
    z1 = jnp.maximum(jnp.dot(h, wf1, preferred_element_type=jnp.float32) + bf1, 0.0)
    z2 = jnp.maximum(jnp.dot(z1, wf2, preferred_element_type=jnp.float32) + bf2, 0.0)
    z3 = jnp.dot(z2, wf3, preferred_element_type=jnp.float32) + bf3     # (B, 1)

    # Numerically stable sigmoid (two-branch form).
    pos = 1.0 / (1.0 + jnp.exp(-z3))
    ez = jnp.exp(z3)
    neg = ez / (1.0 + ez)
    out_ref[...] = jnp.where(z3 >= 0.0, pos, neg)


def pack_params(params):
    """One-time, host-side (numpy) packing of the 10 torch-shaped parameters
    into a single (P_ROWS, P_LANES) f32 VMEM slab."""
    (w1, b1, w2, b2, fw1, fb1, fw2, fb2, fw3, fb3) = [
        np.asarray(p, dtype=np.float32) for p in params]

    slab = np.zeros((P_ROWS, P_LANES), np.float32)
    slab[W1_ROW:W1_ROW + K, 0:C1] = w1.transpose(2, 1, 0).reshape(K, C1)   # [k,c]=w1[c,0,k]
    slab[B1_ROW, 0:C1] = b1
    slab[B2_ROW, 0:C2] = b2
    slab[W2_ROW:W2_ROW + K * C1, 0:C2] = w2.transpose(2, 1, 0).reshape(K * C1, C2)
    # torch fc1.weight is (FC1_OUT, C2*LP2) over a (C, L)-major flatten; reorder its
    # rows to the kernel's l-major flatten: wf1[l*C2 + c, o] = fw1[o, c*LP2 + l]
    wf1 = fw1.reshape(FC1_OUT, C2, LP2).transpose(2, 1, 0).reshape(FC1_IN, FC1_OUT)
    slab[WF1_ROW:WF1_ROW + FC1_IN, 0:FC1_OUT] = wf1
    slab[WF2_ROW:WF2_ROW + FC1_OUT, 0:FC2_OUT] = fw2.T
    slab[WF3_ROW:WF3_ROW + FC2_OUT, 0:FC3_OUT] = fw3.T
    slab[BF1_ROW, 0:FC1_OUT] = fb1
    slab[BF2_ROW, 0:FC2_OUT] = fb2
    slab[BF3_ROW, 0:FC3_OUT] = fb3
    return jnp.asarray(slab)


def discriminator_forward(x_ncl, param_slab):
    """x_ncl: (B, 1, SIGNAL_LEN) float32 (torch NCL layout). param_slab: pack_params(...)."""
    B = x_ncl.shape[0]
    # xq[q*B + b, r] = x[b, 0, 4q + r]  -> conv1 phase layout, batch inside sublanes.
    xq = jnp.transpose(x_ncl.astype(jnp.float32).reshape(B, NQ, 4),
                       (1, 0, 2)).reshape(NQ * B, 4)
    return pl.pallas_call(
        discriminator_kernel,
        out_shape=jax.ShapeDtypeStruct((B, 1), jnp.float32),
        in_specs=[pl.BlockSpec(memory_space=pltpu.MemorySpace.VMEM),
                  pl.BlockSpec(memory_space=pltpu.MemorySpace.VMEM)],
        out_specs=pl.BlockSpec(memory_space=pltpu.MemorySpace.VMEM),
    )(xq, param_slab)
    # TODO(synk): for very large B on v7x, add a leading batch grid axis with
    # dimension_semantics=("parallel",) to shard across the two TensorCores.


def discriminator_ref(x_ncl, params):
    """Pure-JAX reference with torch-native layouts/semantics."""
    (w1, b1, w2, b2, fw1, fb1, fw2, fb2, fw3, fb3) = params
    dn = ('NCH', 'OIH', 'NCH')
    h = lax.conv_general_dilated(x_ncl, w1, (1,), 'VALID', dimension_numbers=dn)
    h = jax.nn.relu(h + b1[None, :, None])
    h = lax.reduce_window(h, -jnp.inf, lax.max, (1, 1, 2), (1, 1, 2), 'VALID')
    h = lax.conv_general_dilated(h, w2, (1,), 'VALID', dimension_numbers=dn)
    h = jax.nn.relu(h + b2[None, :, None])
    h = lax.reduce_window(h, -jnp.inf, lax.max, (1, 1, 2), (1, 1, 2), 'VALID')
    f = h.reshape(h.shape[0], -1)                     # (B, C2*LP2), (C, L)-major
    z = jax.nn.relu(f @ fw1.T + fb1)
    z = jax.nn.relu(z @ fw2.T + fb2)
    z = z @ fw3.T + fb3
    return jax.nn.sigmoid(z)


if __name__ == "__main__":
    key = jax.random.PRNGKey(0)
    ks = jax.random.split(key, 11)

    def u(k, shape, scale=0.2):
        return jax.random.uniform(k, shape, jnp.float32, -scale, scale)

    # Deterministic synthetic parameters (torch shapes).
    w1 = u(ks[0], (C1, 1, K));           b1 = u(ks[1], (C1,))
    w2 = u(ks[2], (C2, C1, K));          b2 = u(ks[3], (C2,))
    fw1 = u(ks[4], (FC1_OUT, FC1_IN));   fb1 = u(ks[5], (FC1_OUT,))
    fw2 = u(ks[6], (FC2_OUT, FC1_OUT));  fb2 = u(ks[7], (FC2_OUT,))
    fw3 = u(ks[8], (FC3_OUT, FC2_OUT));  fb3 = u(ks[9], (FC3_OUT,))
    params = (w1, b1, w2, b2, fw1, fb1, fw2, fb2, fw3, fb3)

    # One-time parameter packing (host-side numpy; reused across every forward call).
    slab = pack_params(params)

    x = jax.random.normal(ks[10], (2, 1, SIGNAL_LEN), jnp.float32)

    out = jax.block_until_ready(discriminator_forward(x, slab))
    ref = jax.block_until_ready(discriminator_ref(x, params))

    assert out.shape == (2, 1)
    np.testing.assert_allclose(np.asarray(out), np.asarray(ref), rtol=1e-5, atol=1e-5)

    print("KERNEL_OK")
</pallas_src>

<mosaic_0001>
module attributes {stable_mosaic.version = 11 : i64} {
  func.func @discriminator_kernel(%arg0: memref<16x4xf32, #tpu.memory_space<vmem>>, %arg1: memref<248x128xf32, #tpu.memory_space<vmem>>, %arg2: memref<2x1xf32, #tpu.memory_space<vmem>>) attributes {dimension_semantics = [], scalar_prefetch = 0 : i64, scratch_operands = 0 : i64, tpu.core_type = #tpu.core_type<tc>} {
    %c0 = arith.constant 0 : index
    %c0_0 = arith.constant 0 : index
    %0 = vector.load %arg1[%c0, %c0_0] : memref<248x128xf32, #tpu.memory_space<vmem>>, vector<5x6xf32>
    %1 = vector.extract_strided_slice %0 {offsets = [0, 0], sizes = [1, 6], strides = [1, 1]} : vector<5x6xf32> to vector<1x6xf32>
    %2 = vector.extract_strided_slice %0 {offsets = [1, 0], sizes = [1, 6], strides = [1, 1]} : vector<5x6xf32> to vector<1x6xf32>
    %3 = vector.extract_strided_slice %0 {offsets = [2, 0], sizes = [1, 6], strides = [1, 1]} : vector<5x6xf32> to vector<1x6xf32>
    %4 = vector.extract_strided_slice %0 {offsets = [3, 0], sizes = [1, 6], strides = [1, 1]} : vector<5x6xf32> to vector<1x6xf32>
    %5 = vector.extract_strided_slice %0 {offsets = [4, 0], sizes = [1, 6], strides = [1, 1]} : vector<5x6xf32> to vector<1x6xf32>
    %c8 = arith.constant 8 : index
    %c0_1 = arith.constant 0 : index
    %6 = vector.load %arg1[%c8, %c0_1] : memref<248x128xf32, #tpu.memory_space<vmem>>, vector<1x6xf32>
    %c16 = arith.constant 16 : index
    %c0_2 = arith.constant 0 : index
    %7 = vector.load %arg1[%c16, %c0_2] : memref<248x128xf32, #tpu.memory_space<vmem>>, vector<1x15xf32>
    %c24 = arith.constant 24 : index
    %c0_3 = arith.constant 0 : index
    %8 = vector.load %arg1[%c24, %c0_3] : memref<248x128xf32, #tpu.memory_space<vmem>>, vector<30x15xf32>
    %c56 = arith.constant 56 : index
    %c0_4 = arith.constant 0 : index
    %9 = vector.load %arg1[%c56, %c0_4] : memref<248x128xf32, #tpu.memory_space<vmem>>, vector<75x52xf32>
    %c224 = arith.constant 224 : index
    %c0_5 = arith.constant 0 : index
    %10 = vector.load %arg1[%c224, %c0_5] : memref<248x128xf32, #tpu.memory_space<vmem>>, vector<1x52xf32>
    %c136 = arith.constant 136 : index
    %c0_6 = arith.constant 0 : index
    %11 = vector.load %arg1[%c136, %c0_6] : memref<248x128xf32, #tpu.memory_space<vmem>>, vector<52x26xf32>
    %c232 = arith.constant 232 : index
    %c0_7 = arith.constant 0 : index
    %12 = vector.load %arg1[%c232, %c0_7] : memref<248x128xf32, #tpu.memory_space<vmem>>, vector<1x26xf32>
    %c192 = arith.constant 192 : index
    %c0_8 = arith.constant 0 : index
    %13 = vector.load %arg1[%c192, %c0_8] : memref<248x128xf32, #tpu.memory_space<vmem>>, vector<26x1xf32>
    %c240 = arith.constant 240 : index
    %c0_9 = arith.constant 0 : index
    %14 = vector.load %arg1[%c240, %c0_9] : memref<248x128xf32, #tpu.memory_space<vmem>>, vector<1x1xf32>
    %c0_10 = arith.constant 0 : index
    %c0_11 = arith.constant 0 : index
    %15 = vector.load %arg0[%c0_10, %c0_11] : memref<16x4xf32, #tpu.memory_space<vmem>>, vector<16x4xf32>
    %16 = vector.extract_strided_slice %15 {offsets = [0, 0], sizes = [16, 1], strides = [1, 1]} : vector<16x4xf32> to vector<16x1xf32>
    %17 = vector.extract_strided_slice %15 {offsets = [0, 1], sizes = [16, 1], strides = [1, 1]} : vector<16x4xf32> to vector<16x1xf32>
    %18 = vector.extract_strided_slice %15 {offsets = [0, 2], sizes = [16, 1], strides = [1, 1]} : vector<16x4xf32> to vector<16x1xf32>
    %19 = vector.extract_strided_slice %15 {offsets = [0, 3], sizes = [16, 1], strides = [1, 1]} : vector<16x4xf32> to vector<16x1xf32>
    %20 = vector.extract_strided_slice %16 {offsets = [0, 0], sizes = [14, 1], strides = [1, 1]} : vector<16x1xf32> to vector<14x1xf32>
    %21 = vector.extract_strided_slice %17 {offsets = [0, 0], sizes = [14, 1], strides = [1, 1]} : vector<16x1xf32> to vector<14x1xf32>
    %22 = vector.extract_strided_slice %18 {offsets = [0, 0], sizes = [14, 1], strides = [1, 1]} : vector<16x1xf32> to vector<14x1xf32>
    %23 = vector.extract_strided_slice %19 {offsets = [0, 0], sizes = [14, 1], strides = [1, 1]} : vector<16x1xf32> to vector<14x1xf32>
    %24 = vector.extract_strided_slice %16 {offsets = [2, 0], sizes = [14, 1], strides = [1, 1]} : vector<16x1xf32> to vector<14x1xf32>
    %25 = vector.extract_strided_slice %17 {offsets = [2, 0], sizes = [14, 1], strides = [1, 1]} : vector<16x1xf32> to vector<14x1xf32>
    %26 = vector.extract_strided_slice %18 {offsets = [2, 0], sizes = [14, 1], strides = [1, 1]} : vector<16x1xf32> to vector<14x1xf32>
    %27 = vector.extract_strided_slice %19 {offsets = [2, 0], sizes = [14, 1], strides = [1, 1]} : vector<16x1xf32> to vector<14x1xf32>
    %28 = vector.broadcast %20 : vector<14x1xf32> to vector<14x6xf32>
    %29 = vector.broadcast %1 : vector<1x6xf32> to vector<14x6xf32>
    %30 = arith.mulf %28, %29 : vector<14x6xf32>
    %31 = vector.broadcast %21 : vector<14x1xf32> to vector<14x6xf32>
    %32 = vector.broadcast %2 : vector<1x6xf32> to vector<14x6xf32>
    %33 = arith.mulf %31, %32 : vector<14x6xf32>
    %34 = arith.addf %30, %33 : vector<14x6xf32>
    %35 = vector.broadcast %22 : vector<14x1xf32> to vector<14x6xf32>
    %36 = vector.broadcast %3 : vector<1x6xf32> to vector<14x6xf32>
    %37 = arith.mulf %35, %36 : vector<14x6xf32>
    %38 = arith.addf %34, %37 : vector<14x6xf32>
    %39 = vector.broadcast %23 : vector<14x1xf32> to vector<14x6xf32>
    %40 = vector.broadcast %4 : vector<1x6xf32> to vector<14x6xf32>
    %41 = arith.mulf %39, %40 : vector<14x6xf32>
    %42 = arith.addf %38, %41 : vector<14x6xf32>
    %43 = vector.broadcast %24 : vector<14x1xf32> to vector<14x6xf32>
    %44 = vector.broadcast %5 : vector<1x6xf32> to vector<14x6xf32>
    %45 = arith.mulf %43, %44 : vector<14x6xf32>
    %46 = arith.addf %42, %45 : vector<14x6xf32>
    %47 = vector.broadcast %21 : vector<14x1xf32> to vector<14x6xf32>
    %48 = vector.broadcast %1 : vector<1x6xf32> to vector<14x6xf32>
    %49 = arith.mulf %47, %48 : vector<14x6xf32>
    %50 = vector.broadcast %22 : vector<14x1xf32> to vector<14x6xf32>
    %51 = vector.broadcast %2 : vector<1x6xf32> to vector<14x6xf32>
    %52 = arith.mulf %50, %51 : vector<14x6xf32>
    %53 = arith.addf %49, %52 : vector<14x6xf32>
    %54 = vector.broadcast %23 : vector<14x1xf32> to vector<14x6xf32>
    %55 = vector.broadcast %3 : vector<1x6xf32> to vector<14x6xf32>
    %56 = arith.mulf %54, %55 : vector<14x6xf32>
    %57 = arith.addf %53, %56 : vector<14x6xf32>
    %58 = vector.broadcast %24 : vector<14x1xf32> to vector<14x6xf32>
    %59 = vector.broadcast %4 : vector<1x6xf32> to vector<14x6xf32>
    %60 = arith.mulf %58, %59 : vector<14x6xf32>
    %61 = arith.addf %57, %60 : vector<14x6xf32>
    %62 = vector.broadcast %25 : vector<14x1xf32> to vector<14x6xf32>
    %63 = vector.broadcast %5 : vector<1x6xf32> to vector<14x6xf32>
    %64 = arith.mulf %62, %63 : vector<14x6xf32>
    %65 = arith.addf %61, %64 : vector<14x6xf32>
    %66 = vector.broadcast %22 : vector<14x1xf32> to vector<14x6xf32>
    %67 = vector.broadcast %1 : vector<1x6xf32> to vector<14x6xf32>
    %68 = arith.mulf %66, %67 : vector<14x6xf32>
    %69 = vector.broadcast %23 : vector<14x1xf32> to vector<14x6xf32>
    %70 = vector.broadcast %2 : vector<1x6xf32> to vector<14x6xf32>
    %71 = arith.mulf %69, %70 : vector<14x6xf32>
    %72 = arith.addf %68, %71 : vector<14x6xf32>
    %73 = vector.broadcast %24 : vector<14x1xf32> to vector<14x6xf32>
    %74 = vector.broadcast %3 : vector<1x6xf32> to vector<14x6xf32>
    %75 = arith.mulf %73, %74 : vector<14x6xf32>
    %76 = arith.addf %72, %75 : vector<14x6xf32>
    %77 = vector.broadcast %25 : vector<14x1xf32> to vector<14x6xf32>
    %78 = vector.broadcast %4 : vector<1x6xf32> to vector<14x6xf32>
    %79 = arith.mulf %77, %78 : vector<14x6xf32>
    %80 = arith.addf %76, %79 : vector<14x6xf32>
    %81 = vector.broadcast %26 : vector<14x1xf32> to vector<14x6xf32>
    %82 = vector.broadcast %5 : vector<1x6xf32> to vector<14x6xf32>
    %83 = arith.mulf %81, %82 : vector<14x6xf32>
    %84 = arith.addf %80, %83 : vector<14x6xf32>
    %85 = vector.broadcast %23 : vector<14x1xf32> to vector<14x6xf32>
    %86 = vector.broadcast %1 : vector<1x6xf32> to vector<14x6xf32>
    %87 = arith.mulf %85, %86 : vector<14x6xf32>
    %88 = vector.broadcast %24 : vector<14x1xf32> to vector<14x6xf32>
    %89 = vector.broadcast %2 : vector<1x6xf32> to vector<14x6xf32>
    %90 = arith.mulf %88, %89 : vector<14x6xf32>
    %91 = arith.addf %87, %90 : vector<14x6xf32>
    %92 = vector.broadcast %25 : vector<14x1xf32> to vector<14x6xf32>
    %93 = vector.broadcast %3 : vector<1x6xf32> to vector<14x6xf32>
    %94 = arith.mulf %92, %93 : vector<14x6xf32>
    %95 = arith.addf %91, %94 : vector<14x6xf32>
    %96 = vector.broadcast %26 : vector<14x1xf32> to vector<14x6xf32>
    %97 = vector.broadcast %4 : vector<1x6xf32> to vector<14x6xf32>
    %98 = arith.mulf %96, %97 : vector<14x6xf32>
    %99 = arith.addf %95, %98 : vector<14x6xf32>
    %100 = vector.broadcast %27 : vector<14x1xf32> to vector<14x6xf32>
    %101 = vector.broadcast %5 : vector<1x6xf32> to vector<14x6xf32>
    %102 = arith.mulf %100, %101 : vector<14x6xf32>
    %103 = arith.addf %99, %102 : vector<14x6xf32>
    %104 = arith.maximumf %46, %65 : vector<14x6xf32>
    %105 = vector.broadcast %6 : vector<1x6xf32> to vector<14x6xf32>
    %106 = arith.addf %104, %105 : vector<14x6xf32>
    %cst = arith.constant 0.000000e+00 : f32
    %107 = vector.broadcast %cst : f32 to vector<14x6xf32>
    %108 = arith.maximumf %106, %107 : vector<14x6xf32>
    %109 = arith.maximumf %84, %103 : vector<14x6xf32>
    %110 = vector.broadcast %6 : vector<1x6xf32> to vector<14x6xf32>
    %111 = arith.addf %109, %110 : vector<14x6xf32>
    %cst_12 = arith.constant 0.000000e+00 : f32
    %112 = vector.broadcast %cst_12 : f32 to vector<14x6xf32>
    %113 = arith.maximumf %111, %112 : vector<14x6xf32>
    %114 = vector.extract_strided_slice %108 {offsets = [0, 0], sizes = [10, 6], strides = [1, 1]} : vector<14x6xf32> to vector<10x6xf32>
    %115 = vector.extract_strided_slice %113 {offsets = [0, 0], sizes = [10, 6], strides = [1, 1]} : vector<14x6xf32> to vector<10x6xf32>
    %116 = tpu.concatenate %114, %115 in 0 : vector<10x6xf32>, vector<10x6xf32> -> vector<20x6xf32>
    %117 = vector.extract_strided_slice %113 {offsets = [0, 0], sizes = [10, 6], strides = [1, 1]} : vector<14x6xf32> to vector<10x6xf32>
    %118 = vector.extract_strided_slice %108 {offsets = [2, 0], sizes = [10, 6], strides = [1, 1]} : vector<14x6xf32> to vector<10x6xf32>
    %119 = tpu.concatenate %117, %118 in 0 : vector<10x6xf32>, vector<10x6xf32> -> vector<20x6xf32>
    %120 = vector.extract_strided_slice %108 {offsets = [2, 0], sizes = [10, 6], strides = [1, 1]} : vector<14x6xf32> to vector<10x6xf32>
    %121 = vector.extract_strided_slice %113 {offsets = [2, 0], sizes = [10, 6], strides = [1, 1]} : vector<14x6xf32> to vector<10x6xf32>
    %122 = tpu.concatenate %120, %121 in 0 : vector<10x6xf32>, vector<10x6xf32> -> vector<20x6xf32>
    %123 = vector.extract_strided_slice %113 {offsets = [2, 0], sizes = [10, 6], strides = [1, 1]} : vector<14x6xf32> to vector<10x6xf32>
    %124 = vector.extract_strided_slice %108 {offsets = [4, 0], sizes = [10, 6], strides = [1, 1]} : vector<14x6xf32> to vector<10x6xf32>
    %125 = tpu.concatenate %123, %124 in 0 : vector<10x6xf32>, vector<10x6xf32> -> vector<20x6xf32>
    %126 = vector.extract_strided_slice %108 {offsets = [4, 0], sizes = [10, 6], strides = [1, 1]} : vector<14x6xf32> to vector<10x6xf32>
    %127 = vector.extract_strided_slice %113 {offsets = [4, 0], sizes = [10, 6], strides = [1, 1]} : vector<14x6xf32> to vector<10x6xf32>
    %128 = tpu.concatenate %126, %127 in 0 : vector<10x6xf32>, vector<10x6xf32> -> vector<20x6xf32>
    %129 = tpu.concatenate %116, %119, %122, %125, %128 in 1 : vector<20x6xf32>, vector<20x6xf32>, vector<20x6xf32>, vector<20x6xf32>, vector<20x6xf32> -> vector<20x30xf32>
    %cst_13 = arith.constant dense<0.000000e+00> : vector<20x15xf32>
    %130 = tpu.matmul %129, %8, %cst_13 {dimension_numbers = #tpu.dot_dimension_numbers<[1], [0], [0], [1], [0, 0, 1, 1], [], []>} : vector<20x30xf32>, vector<30x15xf32>, vector<20x15xf32> -> vector<20x15xf32>
    %131 = vector.broadcast %7 : vector<1x15xf32> to vector<20x15xf32>
    %132 = arith.addf %130, %131 : vector<20x15xf32>
    %cst_14 = arith.constant 0.000000e+00 : f32
    %133 = vector.broadcast %cst_14 : f32 to vector<20x15xf32>
    %134 = arith.maximumf %132, %133 : vector<20x15xf32>
    %135 = vector.extract_strided_slice %134 {offsets = [0, 0], sizes = [10, 15], strides = [1, 1]} : vector<20x15xf32> to vector<10x15xf32>
    %136 = vector.extract_strided_slice %134 {offsets = [10, 0], sizes = [10, 15], strides = [1, 1]} : vector<20x15xf32> to vector<10x15xf32>
    %137 = arith.maximumf %135, %136 : vector<10x15xf32>
    %138 = vector.extract_strided_slice %137 {offsets = [0, 0], sizes = [2, 15], strides = [1, 1]} : vector<10x15xf32> to vector<2x15xf32>
    %139 = vector.extract_strided_slice %137 {offsets = [2, 0], sizes = [2, 15], strides = [1, 1]} : vector<10x15xf32> to vector<2x15xf32>
    %140 = vector.extract_strided_slice %137 {offsets = [4, 0], sizes = [2, 15], strides = [1, 1]} : vector<10x15xf32> to vector<2x15xf32>
    %141 = vector.extract_strided_slice %137 {offsets = [6, 0], sizes = [2, 15], strides = [1, 1]} : vector<10x15xf32> to vector<2x15xf32>
    %142 = vector.extract_strided_slice %137 {offsets = [8, 0], sizes = [2, 15], strides = [1, 1]} : vector<10x15xf32> to vector<2x15xf32>
    %143 = tpu.concatenate %138, %139, %140, %141, %142 in 1 : vector<2x15xf32>, vector<2x15xf32>, vector<2x15xf32>, vector<2x15xf32>, vector<2x15xf32> -> vector<2x75xf32>
    %cst_15 = arith.constant dense<0.000000e+00> : vector<2x52xf32>
    %144 = tpu.matmul %143, %9, %cst_15 {dimension_numbers = #tpu.dot_dimension_numbers<[1], [0], [0], [1], [0, 0, 1, 1], [], []>} : vector<2x75xf32>, vector<75x52xf32>, vector<2x52xf32> -> vector<2x52xf32>
    %145 = vector.broadcast %10 : vector<1x52xf32> to vector<2x52xf32>
    %146 = arith.addf %144, %145 : vector<2x52xf32>
    %cst_16 = arith.constant 0.000000e+00 : f32
    %147 = vector.broadcast %cst_16 : f32 to vector<2x52xf32>
    %148 = arith.maximumf %146, %147 : vector<2x52xf32>
    %cst_17 = arith.constant dense<0.000000e+00> : vector<2x26xf32>
    %149 = tpu.matmul %148, %11, %cst_17 {dimension_numbers = #tpu.dot_dimension_numbers<[1], [0], [0], [1], [0, 0, 1, 1], [], []>} : vector<2x52xf32>, vector<52x26xf32>, vector<2x26xf32> -> vector<2x26xf32>
    %150 = vector.broadcast %12 : vector<1x26xf32> to vector<2x26xf32>
    %151 = arith.addf %149, %150 : vector<2x26xf32>
    %cst_18 = arith.constant 0.000000e+00 : f32
    %152 = vector.broadcast %cst_18 : f32 to vector<2x26xf32>
    %153 = arith.maximumf %151, %152 : vector<2x26xf32>
    %cst_19 = arith.constant dense<0.000000e+00> : vector<2x1xf32>
    %154 = tpu.matmul %153, %13, %cst_19 {dimension_numbers = #tpu.dot_dimension_numbers<[1], [0], [0], [1], [0, 0, 1, 1], [], []>} : vector<2x26xf32>, vector<26x1xf32>, vector<2x1xf32> -> vector<2x1xf32>
    %155 = vector.broadcast %14 : vector<1x1xf32> to vector<2x1xf32>
    %156 = arith.addf %154, %155 : vector<2x1xf32>
    %cst_20 = arith.constant 0.000000e+00 : f32
    %157 = vector.broadcast %cst_20 : f32 to vector<2x1xf32>
    %158 = arith.subf %157, %156 : vector<2x1xf32>
    %159 = math.exp %158 : vector<2x1xf32>
    %cst_21 = arith.constant 1.000000e+00 : f32
    %160 = vector.broadcast %cst_21 : f32 to vector<2x1xf32>
    %161 = arith.addf %160, %159 : vector<2x1xf32>
    %cst_22 = arith.constant 1.000000e+00 : f32
    %162 = vector.broadcast %cst_22 : f32 to vector<2x1xf32>
    %163 = arith.divf %162, %161 : vector<2x1xf32>
    %164 = math.exp %156 : vector<2x1xf32>
    %cst_23 = arith.constant 1.000000e+00 : f32
    %165 = vector.broadcast %cst_23 : f32 to vector<2x1xf32>
    %166 = arith.addf %165, %164 : vector<2x1xf32>
    %167 = arith.divf %164, %166 : vector<2x1xf32>
    %cst_24 = arith.constant 0.000000e+00 : f32
    %168 = vector.broadcast %cst_24 : f32 to vector<2x1xf32>
    %169 = arith.cmpf oge, %156, %168 : vector<2x1xf32>
    %170 = arith.select %169, %163, %167 : vector<2x1xi1>, vector<2x1xf32>
    %c0_25 = arith.constant 0 : index
    %c0_26 = arith.constant 0 : index
    %171 = vector.load %arg2[%c0_25, %c0_26] : memref<2x1xf32, #tpu.memory_space<vmem>>, vector<2x1xf32>
    tpu.vector_store %arg2[%c0_25, %c0_26], %170 {strides = array<i32>} : memref<2x1xf32, #tpu.memory_space<vmem>>, vector<2x1xf32>,
    return
  }
}

</mosaic_0001>

<llo_original>
// kernel: tpu_custom_call.1
$region0: #{tpu_custom_call.1}
  #allocation0 [shape = 'u32[]', space=smem, size = 0x4, offset = 0x4, fixed_abs, tag = 'smem constant byte address 0x4 - core index']
  #allocation1 [shape = 'u32[144,128]{1,0:T(1,128)}', space=vmem, size = 0x12000, scoped, tag = 'internal scratch']
  %s0 = inlined_call_operand.vmem [shape: f32[16,4], index: 0, kind: input, shape index: {}]
  %s1 = inlined_call_operand.hbm [shape: f32[248,128], index: 1, kind: input, shape index: {}]
  %s2 = inlined_call_operand.vmem [shape: f32[2,1], index: 2, kind: output, shape index: {}]
  %s3 = sld [smem:[#allocation0]]
  $region22: #{tpu_custom_call.1} parent=0
    _
  %s5 = ssub.s32 1, %s3
  %s6 = scalar_select 0, %s5, %s3
  $region1: #{tpu_custom_call.1} parent=0
    #allocation2 [shape = 'u8[126976]{0}', space=vmem, size = 0x1f000, scoped, tag = 'input window, operand 1, single buffered']
    #allocation3 [shape = 's32[1]{0}', space=sflag, size = 0x4, scoped, tag = 'scoped memory for tpu_custom_call.1']
    %7 = vsyncpa [#allocation3], 0
    // Predicated region
    $region2: #{tpu_custom_call.1} parent=1 // pred_check
      _
    $region3: #{tpu_custom_call.1} parent=1 // pred_check_branch
      %9 = sbr.rel (0) target = $region5
    $region4: #{tpu_custom_call.1} parent=1 // pred_region
      _
    $region5: #{tpu_custom_call.1} parent=1 // pred_fallthru
      _
    // Predicated region
    $region6: #{tpu_custom_call.1} parent=1 // pred_check
      _
    $region7: #{tpu_custom_call.1} parent=1 // pred_check_branch
      %11 = sbr.rel (0) target = $region9
    $region8: #{tpu_custom_call.1} parent=1 // pred_region
      %s13 = ssub.s32 3968, 3968
      %14 = vsyncadd [#allocation3], %s13
      %s15 = sshll.u32 [#allocation2], 4
      %s16 = int_to_ptr.vmem [resolvable:$true] %s15
      %21 = dma.hbm_to_vmem [thread:$0]  %s1, 3968, %s16, [#allocation3], 128, 128, 8
    $region9: #{tpu_custom_call.1} parent=1 // pred_fallthru
      _
    // Predicated region
    $region10: #{tpu_custom_call.1} parent=1 // pred_check
      _
    $region11: #{tpu_custom_call.1} parent=1 // pred_check_branch
      %23 = sbr.rel (0) target = $region13
    $region12: #{tpu_custom_call.1} parent=1 // pred_region
      %24 = dma.done [#allocation3], 3968
    $region13: #{tpu_custom_call.1} parent=1 // pred_fallthru
      _
    %v25 = vld [vmem:[#allocation2] sm:$0x1f]
    %v26 = vld [vmem:[#allocation2 + $0x8] sm:$0x1]
    %v27 = vld [vmem:[#allocation2 + $0x10] sm:$0x1]
    %v28 = vld [vmem:[#allocation2 + $0x18] sm:$0xff]
    %v29 = vld [vmem:[#allocation2 + $0x20] sm:$0xff]
    %v30 = vld [vmem:[#allocation2 + $0x28] sm:$0xff]
    %v31 = vld [vmem:[#allocation2 + $0x30] sm:$0x3f]
    %v32 = vld [vmem:[#allocation2 + $0x38] sm:$0xff]
    %v33 = vld [vmem:[#allocation2 + $0x40] sm:$0xff]
    %v34 = vld [vmem:[#allocation2 + $0x48] sm:$0xff]
    %v35 = vld [vmem:[#allocation2 + $0x50] sm:$0xff]
    %v36 = vld [vmem:[#allocation2 + $0x58] sm:$0xff]
    %v37 = vld [vmem:[#allocation2 + $0x60] sm:$0xff]
    %v38 = vld [vmem:[#allocation2 + $0x68] sm:$0xff]
    %v39 = vld [vmem:[#allocation2 + $0x70] sm:$0xff]
    %v40 = vld [vmem:[#allocation2 + $0x78] sm:$0xff]
    %v41 = vld [vmem:[#allocation2 + $0x80] sm:$0x7]
    %v42 = vld [vmem:[#allocation2 + $0xe0] sm:$0x1]
    %v43 = vld [vmem:[#allocation2 + $0x88] sm:$0xff]
    %v44 = vld [vmem:[#allocation2 + $0x90] sm:$0xff]
    %v45 = vld [vmem:[#allocation2 + $0x98] sm:$0xff]
    %v46 = vld [vmem:[#allocation2 + $0xa0] sm:$0xff]
    %v47 = vld [vmem:[#allocation2 + $0xa8] sm:$0xff]
    %v48 = vld [vmem:[#allocation2 + $0xb0] sm:$0xff]
    %v49 = vld [vmem:[#allocation2 + $0xb8] sm:$0xf]
    %v50 = vld [vmem:[#allocation2 + $0xe8] sm:$0x1]
    %v51 = vld [vmem:[#allocation2 + $0xc0] sm:$0xff]
    %v52 = vld [vmem:[#allocation2 + $0xc8] sm:$0xff]
    %v53 = vld [vmem:[#allocation2 + $0xd0] sm:$0xff]
    %v54 = vld [vmem:[#allocation2 + $0xd8] sm:$0x3]
    %v55 = vld [vmem:[#allocation2 + $0xf0] sm:$0x1]
    %v56 = vld [vmem:[%s0] sm:$0xff]
    %v57 = vld [vmem:[%s0 + $0x8] sm:$0xff]
    %59 = vset.pattern.permute.xlu0 0
    %60 = vperm.xlu0 %59, %v56
    %v61 = vpop.permute.xlu0 %60
    %64 = vset.pattern.permute.xlu0 0
    %65 = vperm.xlu0 %64, %v57
    %v66 = vpop.permute.xlu0 %65
    %v68 = vlaneseq
    %v69 = vshrl.u32 %v68, 7
    %v70 = vsub.s32 0, %v69
    %v71 = vrot.slane %v25, %v70
    %v72 = vmul.f32 %v61, %v71
    %v73 = vmul.f32 %v66, %v71
    %74 = vset.pattern.permute.xlu0 1
    %75 = vperm.xlu0 %74, %v56
    %v76 = vpop.permute.xlu0 %75
    %78 = vset.pattern.permute.xlu0 1
    %79 = vperm.xlu0 %78, %v57
    %v80 = vpop.permute.xlu0 %79
    %v82 = vlaneseq
    %v83 = vshrl.u32 %v82, 7
    %v84 = vsub.s32 1, %v83
    %v85 = vrot.slane %v25, %v84
    %v86 = vmul.f32 %v76, %v85
    %v87 = vmul.f32 %v80, %v85
    %v88 = vadd.f32 %v72, %v86
    %v89 = vadd.f32 %v73, %v87
    %90 = vset.pattern.permute.xlu0 2
    %91 = vperm.xlu0 %90, %v56
    %v92 = vpop.permute.xlu0 %91
    %94 = vset.pattern.permute.xlu0 2
    %95 = vperm.xlu0 %94, %v57
    %v96 = vpop.permute.xlu0 %95
    %v98 = vlaneseq
    %v99 = vshrl.u32 %v98, 7
    %v100 = vsub.s32 2, %v99
    %v101 = vrot.slane %v25, %v100
    %v102 = vmul.f32 %v92, %v101
    %v103 = vmul.f32 %v96, %v101
    %v104 = vadd.f32 %v88, %v102
    %v105 = vadd.f32 %v89, %v103
    %106 = vset.pattern.permute.xlu0 3
    %107 = vperm.xlu0 %106, %v56
    %v108 = vpop.permute.xlu0 %107
    %110 = vset.pattern.permute.xlu0 3
    %111 = vperm.xlu0 %110, %v57
    %v112 = vpop.permute.xlu0 %111
    %v114 = vlaneseq
    %v115 = vshrl.u32 %v114, 7
    %v116 = vsub.s32 3, %v115
    %v117 = vrot.slane %v25, %v116
    %v118 = vmul.f32 %v108, %v117
    %v119 = vmul.f32 %v112, %v117
    %v120 = vadd.f32 %v104, %v118
    %v121 = vadd.f32 %v105, %v119
    %v122 = vlaneseq
    %v123 = vshrl.u32 %v122, 7
    %v124 = vsub.s32 4, %v123
    %v125 = vrot.slane %v25, %v124
    %v126 = vmul.f32 %v61, %v125
    %v127 = vmul.f32 %v66, %v125
    %vm130 = vcmask 1045504
    %v131 = vrot.slane %v126, 2
    %v132 = vrot.slane %v127, 2
    %v133 = vsel %vm130, %v131, %v132
    %v136 = vadd.f32 %v120, %v133
    %v137 = vadd.f32 %v121, %v132
    %v138 = vmul.f32 %v76, %v71
    %v139 = vmul.f32 %v80, %v71
    %v140 = vmul.f32 %v92, %v85
    %v141 = vmul.f32 %v96, %v85
    %v142 = vadd.f32 %v138, %v140
    %v143 = vadd.f32 %v139, %v141
    %v144 = vmul.f32 %v108, %v101
    %v145 = vmul.f32 %v112, %v101
    %v146 = vadd.f32 %v142, %v144
    %v147 = vadd.f32 %v143, %v145
    %v148 = vmul.f32 %v61, %v117
    %v149 = vmul.f32 %v66, %v117
    %v152 = vrot.slane %v148, 2
    %v153 = vrot.slane %v149, 2
    %v154 = vsel %vm130, %v152, %v153
    %v157 = vadd.f32 %v146, %v154
    %v158 = vadd.f32 %v147, %v153
    %v159 = vmul.f32 %v76, %v125
    %v160 = vmul.f32 %v80, %v125
    %v163 = vrot.slane %v159, 2
    %v164 = vrot.slane %v160, 2
    %v165 = vsel %vm130, %v163, %v164
    %v168 = vadd.f32 %v157, %v165
    %v169 = vadd.f32 %v158, %v164
    %v170 = vmul.f32 %v92, %v71
    %v171 = vmul.f32 %v96, %v71
    %v172 = vmul.f32 %v108, %v85
    %v173 = vmul.f32 %v112, %v85
    %v174 = vadd.f32 %v170, %v172
    %v175 = vadd.f32 %v171, %v173
    %v176 = vmul.f32 %v61, %v101
    %v177 = vmul.f32 %v66, %v101
    %v180 = vrot.slane %v176, 2
    %v181 = vrot.slane %v177, 2
    %v182 = vsel %vm130, %v180, %v181
    %v185 = vadd.f32 %v174, %v182
    %v186 = vadd.f32 %v175, %v181
    %v187 = vmul.f32 %v76, %v117
    %v188 = vmul.f32 %v80, %v117
    %v191 = vrot.slane %v187, 2
    %v192 = vrot.slane %v188, 2
    %v193 = vsel %vm130, %v191, %v192
    %v196 = vadd.f32 %v185, %v193
    %v197 = vadd.f32 %v186, %v192
    %v198 = vmul.f32 %v92, %v125
    %v199 = vmul.f32 %v96, %v125
    %v202 = vrot.slane %v198, 2
    %v203 = vrot.slane %v199, 2
    %v204 = vsel %vm130, %v202, %v203
    %v207 = vadd.f32 %v196, %v204
    %v208 = vadd.f32 %v197, %v203
    %v209 = vmul.f32 %v108, %v71
    %v210 = vmul.f32 %v112, %v71
    %v211 = vmul.f32 %v61, %v85
    %v212 = vmul.f32 %v66, %v85
    %v215 = vrot.slane %v211, 2
    %v216 = vrot.slane %v212, 2
    %v217 = vsel %vm130, %v215, %v216
    %v220 = vadd.f32 %v209, %v217
    %v221 = vadd.f32 %v210, %v216
    %v222 = vmul.f32 %v76, %v101
    %v223 = vmul.f32 %v80, %v101
    %v226 = vrot.slane %v222, 2
    %v227 = vrot.slane %v223, 2
    %v228 = vsel %vm130, %v226, %v227
    %v231 = vadd.f32 %v220, %v228
    %v232 = vadd.f32 %v221, %v227
    %v233 = vmul.f32 %v92, %v117
    %v234 = vmul.f32 %v96, %v117
    %v237 = vrot.slane %v233, 2
    %v238 = vrot.slane %v234, 2
    %v239 = vsel %vm130, %v237, %v238
    %v242 = vadd.f32 %v231, %v239
    %v243 = vadd.f32 %v232, %v238
    %v244 = vmul.f32 %v108, %v125
    %v245 = vmul.f32 %v112, %v125
    %v248 = vrot.slane %v244, 2
    %v249 = vrot.slane %v245, 2
    %v250 = vsel %vm130, %v248, %v249
    %v253 = vadd.f32 %v242, %v250
    %v254 = vadd.f32 %v243, %v249
    %v255 = vmax.f32 %v136, %v168
    %v256 = vmax.f32 %v137, %v169
    %v257 = vlaneseq
    %v258 = vshrl.u32 %v257, 7
    %v259 = vsub.s32 0, %v258
    %v260 = vrot.slane %v26, %v259
    %v261 = vadd.f32 %v255, %v260
    %v262 = vadd.f32 %v256, %v260
    %v263 = vmax.f32 %v261, 0.0
    %v264 = vmax.f32 %v262, 0.0
    %v265 = vmax.f32 %v207, %v253
    %v266 = vmax.f32 %v208, %v254
    %v267 = vadd.f32 %v265, %v260
    %v268 = vadd.f32 %v266, %v260
    %v269 = vmax.f32 %v267, 0.0
    %v270 = vmax.f32 %v268, 0.0
    %vm273 = vcmask 1041408
    %v274 = vrot.slane %v269, 6
    %v275 = vrot.slane %v270, 6
    %v276 = vsel %vm273, %v274, %v275
    %v279 = vsel %vm273, %v264, %v274
    %v280 = vsel %vm273, %v270, %v263
    %v283 = vrot.slane %v263, 2
    %v284 = vrot.slane %v264, 2
    %v285 = vsel %vm130, %v283, %v284
    %v287 = vsel %vm273, %v284, %v269
    %v288 = vrot.slane %v269, 2
    %v289 = vrot.slane %v270, 2
    %v290 = vsel %vm130, %v288, %v289
    %v293 = vsel %vm273, %v289, %v285
    %vm294 = vcmask 1043456
    %v295 = vrot.slane %v263, 4
    %v296 = vrot.slane %v264, 4
    %v297 = vsel %vm294, %v295, %v296
    %v300 = vsel %vm273, %v296, %v290
    %302 = vrot.lane.b32.xlu0 %v269, 6
    %v303 = vpop.permute.xlu0 %302
    %304 = vrot.lane.b32.xlu0 %v280, 6
    %v305 = vpop.permute.xlu0 %304
    %306 = vrot.lane.b32.xlu0 %v264, 6
    %v307 = vpop.permute.xlu0 %306
    %312 = vrot.lane.b32.xlu0 %v285, 12
    %v313 = vpop.permute.xlu0 %312
    %314 = vrot.lane.b32.xlu0 %v287, 12
    %v315 = vpop.permute.xlu0 %314
    %316 = vrot.lane.b32.xlu0 %v270, 12
    %v317 = vpop.permute.xlu0 %316
    %322 = vrot.lane.b32.xlu0 %v290, 18
    %v323 = vpop.permute.xlu0 %322
    %324 = vrot.lane.b32.xlu0 %v293, 18
    %v325 = vpop.permute.xlu0 %324
    %326 = vrot.lane.b32.xlu0 %v284, 18
    %v327 = vpop.permute.xlu0 %326
    %332 = vrot.lane.b32.xlu0 %v297, 24
    %v333 = vpop.permute.xlu0 %332
    %334 = vrot.lane.b32.xlu0 %v300, 24
    %v335 = vpop.permute.xlu0 %334
    %336 = vrot.lane.b32.xlu0 %v289, 24
    %v337 = vpop.permute.xlu0 %336
    %vm341 = vcmask 48128
    %v342 = vsel %vm341, %v263, %v303
    %v343 = vsel %vm341, %v279, %v305
    %v344 = vsel %vm341, %v276, %v307
    %vm345 = vcmask 97280
    %v346 = vsel %vm345, %v342, %v313
    %v347 = vsel %vm345, %v343, %v315
    %v348 = vsel %vm345, %v344, %v317
    %vm349 = vcmask 146432
    %v350 = vsel %vm349, %v346, %v323
    %v351 = vsel %vm349, %v347, %v325
    %v352 = vsel %vm349, %v348, %v327
    %vm353 = vcmask 195584
    %v354 = vsel %vm353, %v350, %v333
    %v355 = vsel %vm353, %v351, %v335
    %v356 = vsel %vm353, %v352, %v337
    %v357 = vlaneseq
    %v358 = vshrl.u32 %v357, 7
    %v359 = vsub.s32 0, %v358
    %v360 = vrot.slane %v27, %v359
    %vm361 = vcmask 244736
    %v363 = vsel %vm361, %v354, 0
    %v366 = vsel %vm361, %v355, 0
    %v369 = vsel %vm361, %v356, 0
    %v372 = vsel %vm130, %v31, 0
    %374 = vmatprep.subr.mxu0 0.0
    %375 = vmatpush1.msra.mxu0 %v28
    %376 = vmatprep.subr.mxu0 0.0
    %377 = vmatpush1.msra.mxu0 %v29
    %378 = vmatprep.subr.mxu0 0.0
    %379 = vmatpush1.msra.mxu0 %v30
    %380 = vmatprep.subr.mxu0 0.0
    %381 = vmatpush1.msra.mxu0 %v372
    %382 = vmatprep.subr.mxu0 0.0
    %383 = vmatpush1.msra.mxu0 0.0
    %384 = vmatprep.subr.mxu0 0.0
    %385 = vmatpush1.msra.mxu0 0.0
    %386 = vmatprep.subr.mxu0 0.0
    %387 = vmatpush1.msra.mxu0 0.0
    %388 = vmatprep.subr.mxu0 0.0
    %389 = vmatpush1.msra.mxu0 0.0
    %390 = vmatprep.subr.mxu0 0.0
    %391 = vmatpush1.msra.mxu0 0.0
    %392 = vmatprep.subr.mxu0 0.0
    %393 = vmatpush1.msra.mxu0 0.0
    %394 = vmatprep.subr.mxu0 0.0
    %395 = vmatpush1.msra.mxu0 0.0
    %396 = vmatprep.subr.mxu0 0.0
    %397 = vmatpush1.msra.mxu0 0.0
    %398 = vmatprep.subr.mxu0 0.0
    %399 = vmatpush1.msra.mxu0 0.0
    %400 = vmatprep.subr.mxu0 0.0
    %401 = vmatpush1.msra.mxu0 0.0
    %402 = vmatprep.subr.mxu0 0.0
    %403 = vmatpush1.msra.mxu0 0.0
    %404 = vmatprep.subr.mxu0 0.0
    %405 = vmatpush1.msra.mxu0 0.0
    %406 = vmatprep.subr.mxu0 0.0
    %407 = vmatpush1.msra.mxu0 0.0
    %408 = vmatprep.subr.mxu0 0.0
    %409 = vmatpush1.msra.mxu0 0.0
    %410 = vmatprep.subr.mxu0 0.0
    %411 = vmatpush1.msra.mxu0 0.0
    %412 = vmatprep.subr.mxu0 0.0
    %413 = vmatpush1.msra.mxu0 0.0
    %414 = vmatprep.subr.mxu0 0.0
    %415 = vmatpush1.msra.mxu0 0.0
    %416 = vmatprep.subr.mxu0 0.0
    %417 = vmatpush1.msra.mxu0 0.0
    %418 = vmatprep.subr.mxu0 0.0
    %419 = vmatpush1.msra.mxu0 0.0
    %420 = vmatprep.subr.mxu0 0.0
    %421 = vmatpush1.msra.mxu0 0.0
    %422 = vmatprep.subr.mxu0 0.0
    %423 = vmatpush1.msra.mxu0 0.0
    %424 = vmatprep.subr.mxu0 0.0
    %425 = vmatpush1.msra.mxu0 0.0
    %426 = vmatprep.subr.mxu0 0.0
    %427 = vmatpush1.msra.mxu0 0.0
    %428 = vmatprep.subr.mxu0 0.0
    %429 = vmatpush1.msra.mxu0 0.0
    %430 = vmatprep.subr.mxu0 0.0
    %431 = vmatpush1.msra.mxu0 0.0
    %432 = vmatprep.subr.mxu0 0.0
    %433 = vmatpush1.msra.mxu0 0.0
    %434 = vmatprep.subr.mxu0 0.0
    %435 = vmatpush1.msra.mxu0 0.0
    %436 = vmatprep.subr.mxu0 0.0
    %437 = vmatpush1.msra.mxu0 0.0
    %438 = vmatprep.mubr.f32.mxu0 0.0
    %439 = vmatmul.mubr.f32.gmra.mrb[0].mxu0 %v363
    %v440 = vpop.f32.mrb[0].mxu0
    %v441 = vadd.f32 %v360, %v440
    %v442 = vpop.f32.mrb[0].mxu0
    %443 = vmatprep.mubr.f32.mxu0 0.0
    %444 = vmatmul.mubr.f32.gmra.mrb[0].mxu0 %v366
    %v445 = vpop.f32.mrb[0].mxu0
    %v446 = vadd.f32 %v360, %v445
    %v447 = vpop.f32.mrb[0].mxu0
    %448 = vmatprep.mubr.f32.mxu0 0.0
    %449 = vmatmul.mubr.f32.gmra.mrb[0].mxu0 %v369
    %v450 = vpop.f32.mrb[0].mxu0
    %v451 = vadd.f32 %v360, %v450
    %v452 = vpop.f32.mrb[0].mxu0
    %453 = vdwg.mxu0
    %v454 = vmax.f32 %v441, 0.0
    %v455 = vmax.f32 %v446, 0.0
    %v456 = vmax.f32 %v451, 0.0
    %v459 = vrot.slane %v455, 2
    %v460 = vrot.slane %v456, 2
    %v461 = vsel %vm130, %v459, %v460
    %v464 = vmax.f32 %v454, %v461
    %v465 = vmax.f32 %v455, %v460
    %v467 = vrot.slane %v464, 2
    %468 = vrot.lane.b32.xlu0 %v467, 15
    %v469 = vpop.permute.xlu0 %468
    %v471 = vrot.slane %v464, 4
    %472 = vrot.lane.b32.xlu0 %v471, 30
    %v473 = vpop.permute.xlu0 %472
    %v475 = vrot.slane %v464, 6
    %476 = vrot.lane.b32.xlu0 %v475, 45
    %v477 = vpop.permute.xlu0 %476
    %480 = vrot.lane.b32.xlu0 %v465, 60
    %v481 = vpop.permute.xlu0 %480
    %vm483 = vcmask 121856
    %v484 = vsel %vm483, %v464, %v469
    %v485 = vsel %vm361, %v484, %v473
    %vm486 = vcmask 367616
    %v487 = vsel %vm486, %v485, %v477
    %vm488 = vcmask 490496
    %v489 = vsel %vm488, %v487, %v481
    %v490 = vlaneseq
    %v491 = vshrl.u32 %v490, 7
    %v492 = vsub.s32 0, %v491
    %v493 = vrot.slane %v42, %v492
    %vm494 = vcmask 613376
    %v496 = vsel %vm494, %v489, 0
    %vm498 = vcmask 1042432
    %v500 = vsel %vm498, %v41, 0
    %502 = vmatprep.subr.mxu0 0.0
    %503 = vmatpush1.msra.mxu0 %v32
    %504 = vmatprep.subr.mxu0 0.0
    %505 = vmatpush1.msra.mxu0 %v33
    %506 = vmatprep.subr.mxu0 0.0
    %507 = vmatpush1.msra.mxu0 %v34
    %508 = vmatprep.subr.mxu0 0.0
    %509 = vmatpush1.msra.mxu0 %v35
    %510 = vmatprep.subr.mxu0 0.0
    %511 = vmatpush1.msra.mxu0 %v36
    %512 = vmatprep.subr.mxu0 0.0
    %513 = vmatpush1.msra.mxu0 %v37
    %514 = vmatprep.subr.mxu0 0.0
    %515 = vmatpush1.msra.mxu0 %v38
    %516 = vmatprep.subr.mxu0 0.0
    %517 = vmatpush1.msra.mxu0 %v39
    %518 = vmatprep.subr.mxu0 0.0
    %519 = vmatpush1.msra.mxu0 %v40
    %520 = vmatprep.subr.mxu0 0.0
    %521 = vmatpush1.msra.mxu0 %v500
    %522 = vmatprep.subr.mxu0 0.0
    %523 = vmatpush1.msra.mxu0 0.0
    %524 = vmatprep.subr.mxu0 0.0
    %525 = vmatpush1.msra.mxu0 0.0
    %526 = vmatprep.subr.mxu0 0.0
    %527 = vmatpush1.msra.mxu0 0.0
    %528 = vmatprep.subr.mxu0 0.0
    %529 = vmatpush1.msra.mxu0 0.0
    %530 = vmatprep.subr.mxu0 0.0
    %531 = vmatpush1.msra.mxu0 0.0
    %532 = vmatprep.subr.mxu0 0.0
    %533 = vmatpush1.msra.mxu0 0.0
    %534 = vmatprep.subr.mxu0 0.0
    %535 = vmatpush1.msra.mxu0 0.0
    %536 = vmatprep.subr.mxu0 0.0
    %537 = vmatpush1.msra.mxu0 0.0
    %538 = vmatprep.subr.mxu0 0.0
    %539 = vmatpush1.msra.mxu0 0.0
    %540 = vmatprep.subr.mxu0 0.0
    %541 = vmatpush1.msra.mxu0 0.0
    %542 = vmatprep.subr.mxu0 0.0
    %543 = vmatpush1.msra.mxu0 0.0
    %544 = vmatprep.subr.mxu0 0.0
    %545 = vmatpush1.msra.mxu0 0.0
    %546 = vmatprep.subr.mxu0 0.0
    %547 = vmatpush1.msra.mxu0 0.0
    %548 = vmatprep.subr.mxu0 0.0
    %549 = vmatpush1.msra.mxu0 0.0
    %550 = vmatprep.subr.mxu0 0.0
    %551 = vmatpush1.msra.mxu0 0.0
    %552 = vmatprep.subr.mxu0 0.0
    %553 = vmatpush1.msra.mxu0 0.0
    %554 = vmatprep.subr.mxu0 0.0
    %555 = vmatpush1.msra.mxu0 0.0
    %556 = vmatprep.subr.mxu0 0.0
    %557 = vmatpush1.msra.mxu0 0.0
    %558 = vmatprep.subr.mxu0 0.0
    %559 = vmatpush1.msra.mxu0 0.0
    %560 = vmatprep.subr.mxu0 0.0
    %561 = vmatpush1.msra.mxu0 0.0
    %562 = vmatprep.subr.mxu0 0.0
    %563 = vmatpush1.msra.mxu0 0.0
    %564 = vmatprep.subr.mxu0 0.0
    %565 = vmatpush1.msra.mxu0 0.0
    %566 = vmatprep.mubr.f32.mxu0 0.0
    %567 = vmatmul.mubr.f32.gmra.mrb[0].mxu0 %v496
    %v568 = vpop.f32.mrb[0].mxu0
    %v569 = vadd.f32 %v493, %v568
    %v570 = vpop.f32.mrb[0].mxu0
    %571 = vdwg.mxu0
    %v572 = vmax.f32 %v569, 0.0
    %v573 = vlaneseq
    %v574 = vshrl.u32 %v573, 7
    %v575 = vsub.s32 0, %v574
    %v576 = vrot.slane %v50, %v575
    %vm577 = vcmask 424960
    %v579 = vsel %vm577, %v572, 0
    %v582 = vsel %vm294, %v49, 0
    %584 = vmatprep.subr.mxu0 0.0
    %585 = vmatpush1.msra.mxu0 %v43
    %586 = vmatprep.subr.mxu0 0.0
    %587 = vmatpush1.msra.mxu0 %v44
    %588 = vmatprep.subr.mxu0 0.0
    %589 = vmatpush1.msra.mxu0 %v45
    %590 = vmatprep.subr.mxu0 0.0
    %591 = vmatpush1.msra.mxu0 %v46
    %592 = vmatprep.subr.mxu0 0.0
    %593 = vmatpush1.msra.mxu0 %v47
    %594 = vmatprep.subr.mxu0 0.0
    %595 = vmatpush1.msra.mxu0 %v48
    %596 = vmatprep.subr.mxu0 0.0
    %597 = vmatpush1.msra.mxu0 %v582
    %598 = vmatprep.subr.mxu0 0.0
    %599 = vmatpush1.msra.mxu0 0.0
    %600 = vmatprep.subr.mxu0 0.0
    %601 = vmatpush1.msra.mxu0 0.0
    %602 = vmatprep.subr.mxu0 0.0
    %603 = vmatpush1.msra.mxu0 0.0
    %604 = vmatprep.subr.mxu0 0.0
    %605 = vmatpush1.msra.mxu0 0.0
    %606 = vmatprep.subr.mxu0 0.0
    %607 = vmatpush1.msra.mxu0 0.0
    %608 = vmatprep.subr.mxu0 0.0
    %609 = vmatpush1.msra.mxu0 0.0
    %610 = vmatprep.subr.mxu0 0.0
    %611 = vmatpush1.msra.mxu0 0.0
    %612 = vmatprep.subr.mxu0 0.0
    %613 = vmatpush1.msra.mxu0 0.0
    %614 = vmatprep.subr.mxu0 0.0
    %615 = vmatpush1.msra.mxu0 0.0
    %616 = vmatprep.subr.mxu0 0.0
    %617 = vmatpush1.msra.mxu0 0.0
    %618 = vmatprep.subr.mxu0 0.0
    %619 = vmatpush1.msra.mxu0 0.0
    %620 = vmatprep.subr.mxu0 0.0
    %621 = vmatpush1.msra.mxu0 0.0
    %622 = vmatprep.subr.mxu0 0.0
    %623 = vmatpush1.msra.mxu0 0.0
    %624 = vmatprep.subr.mxu0 0.0
    %625 = vmatpush1.msra.mxu0 0.0
    %626 = vmatprep.subr.mxu0 0.0
    %627 = vmatpush1.msra.mxu0 0.0
    %628 = vmatprep.subr.mxu0 0.0
    %629 = vmatpush1.msra.mxu0 0.0
    %630 = vmatprep.subr.mxu0 0.0
    %631 = vmatpush1.msra.mxu0 0.0
    %632 = vmatprep.subr.mxu0 0.0
    %633 = vmatpush1.msra.mxu0 0.0
    %634 = vmatprep.subr.mxu0 0.0
    %635 = vmatpush1.msra.mxu0 0.0
    %636 = vmatprep.subr.mxu0 0.0
    %637 = vmatpush1.msra.mxu0 0.0
    %638 = vmatprep.subr.mxu0 0.0
    %639 = vmatpush1.msra.mxu0 0.0
    %640 = vmatprep.subr.mxu0 0.0
    %641 = vmatpush1.msra.mxu0 0.0
    %642 = vmatprep.subr.mxu0 0.0
    %643 = vmatpush1.msra.mxu0 0.0
    %644 = vmatprep.subr.mxu0 0.0
    %645 = vmatpush1.msra.mxu0 0.0
    %646 = vmatprep.subr.mxu0 0.0
    %647 = vmatpush1.msra.mxu0 0.0
    %648 = vmatprep.mubr.f32.mxu0 0.0
    %649 = vmatmul.mubr.f32.gmra.mrb[0].mxu0 %v579
    %v650 = vpop.f32.mrb[0].mxu0
    %v651 = vadd.f32 %v576, %v650
    %v652 = vpop.f32.mrb[0].mxu0
    %653 = vdwg.mxu0
    %v654 = vmax.f32 %v651, 0.0
    %v655 = vlaneseq
    %v656 = vshrl.u32 %v655, 7
    %v657 = vsub.s32 0, %v656
    %v658 = vrot.slane %v55, %v657
    %vm659 = vcmask 211968
    %v661 = vsel %vm659, %v654, 0
    %v664 = vsel %vm273, %v54, 0
    %666 = vmatprep.subr.mxu0 0.0
    %667 = vmatpush1.msra.mxu0 %v51
    %668 = vmatprep.subr.mxu0 0.0
    %669 = vmatpush1.msra.mxu0 %v52
    %670 = vmatprep.subr.mxu0 0.0
    %671 = vmatpush1.msra.mxu0 %v53
    %672 = vmatprep.subr.mxu0 0.0
    %673 = vmatpush1.msra.mxu0 %v664
    %674 = vmatprep.subr.mxu0 0.0
    %675 = vmatpush1.msra.mxu0 0.0
    %676 = vmatprep.subr.mxu0 0.0
    %677 = vmatpush1.msra.mxu0 0.0
    %678 = vmatprep.subr.mxu0 0.0
    %679 = vmatpush1.msra.mxu0 0.0
    %680 = vmatprep.subr.mxu0 0.0
    %681 = vmatpush1.msra.mxu0 0.0
    %682 = vmatprep.subr.mxu0 0.0
    %683 = vmatpush1.msra.mxu0 0.0
    %684 = vmatprep.subr.mxu0 0.0
    %685 = vmatpush1.msra.mxu0 0.0
    %686 = vmatprep.subr.mxu0 0.0
    %687 = vmatpush1.msra.mxu0 0.0
    %688 = vmatprep.subr.mxu0 0.0
    %689 = vmatpush1.msra.mxu0 0.0
    %690 = vmatprep.subr.mxu0 0.0
    %691 = vmatpush1.msra.mxu0 0.0
    %692 = vmatprep.subr.mxu0 0.0
    %693 = vmatpush1.msra.mxu0 0.0
    %694 = vmatprep.subr.mxu0 0.0
    %695 = vmatpush1.msra.mxu0 0.0
    %696 = vmatprep.subr.mxu0 0.0
    %697 = vmatpush1.msra.mxu0 0.0
    %698 = vmatprep.subr.mxu0 0.0
    %699 = vmatpush1.msra.mxu0 0.0
    %700 = vmatprep.subr.mxu0 0.0
    %701 = vmatpush1.msra.mxu0 0.0
    %702 = vmatprep.subr.mxu0 0.0
    %703 = vmatpush1.msra.mxu0 0.0
    %704 = vmatprep.subr.mxu0 0.0
    %705 = vmatpush1.msra.mxu0 0.0
    %706 = vmatprep.subr.mxu0 0.0
    %707 = vmatpush1.msra.mxu0 0.0
    %708 = vmatprep.subr.mxu0 0.0
    %709 = vmatpush1.msra.mxu0 0.0
    %710 = vmatprep.subr.mxu0 0.0
    %711 = vmatpush1.msra.mxu0 0.0
    %712 = vmatprep.subr.mxu0 0.0
    %713 = vmatpush1.msra.mxu0 0.0
    %714 = vmatprep.subr.mxu0 0.0
    %715 = vmatpush1.msra.mxu0 0.0
    %716 = vmatprep.subr.mxu0 0.0
    %717 = vmatpush1.msra.mxu0 0.0
    %718 = vmatprep.subr.mxu0 0.0
    %719 = vmatpush1.msra.mxu0 0.0
    %720 = vmatprep.subr.mxu0 0.0
    %721 = vmatpush1.msra.mxu0 0.0
    %722 = vmatprep.subr.mxu0 0.0
    %723 = vmatpush1.msra.mxu0 0.0
    %724 = vmatprep.subr.mxu0 0.0
    %725 = vmatpush1.msra.mxu0 0.0
    %726 = vmatprep.subr.mxu0 0.0
    %727 = vmatpush1.msra.mxu0 0.0
    %728 = vmatprep.subr.mxu0 0.0
    %729 = vmatpush1.msra.mxu0 0.0
    %730 = vmatprep.mubr.f32.mxu0 0.0
    %731 = vmatmul.mubr.f32.gmra.mrb[0].mxu0 %v661
    %v732 = vpop.f32.mrb[0].mxu0
    %v733 = vadd.f32 %v658, %v732
    %v734 = vpop.f32.mrb[0].mxu0
    %735 = vdwg.mxu0
    %v736 = vsub.f32 0.0, %v733
    %v737 = vmul.f32 %v736, 1.442695
    %v738 = vpow.pop %v737
    %v739 = vadd.f32 %v738, 1.0
    %v740 = vrcp.pop %v739
    %v741 = vmul.f32 1.0, %v740
    %v742 = vmul.f32 %v733, 1.442695
    %v743 = vpow.pop %v742
    %v744 = vadd.f32 %v743, 1.0
    %v745 = vrcp.pop %v744
    %v746 = vmul.f32 %v743, %v745
    %vm747 = vcmp.ge.f32.partialorder %v733, 0.0
    %v748 = vsel %vm747, %v741, %v746
    %vm749 = vcmask 1024
    %750 = vst.msk [vmem:[%s2] sm:$0x3] %vm749, %v748
    // Predicated region
    $region14: #{tpu_custom_call.1} parent=1 // pred_check
      _
    $region15: #{tpu_custom_call.1} parent=1 // pred_check_branch
      %752 = sbr.rel (0) target = $region17
    $region16: #{tpu_custom_call.1} parent=1 // pred_region
      _
    $region17: #{tpu_custom_call.1} parent=1 // pred_fallthru
      _
    // Predicated region
    $region18: #{tpu_custom_call.1} parent=1 // pred_check
      _
    $region19: #{tpu_custom_call.1} parent=1 // pred_check_branch
      %754 = sbr.rel (0) target = $region21
    $region20: #{tpu_custom_call.1} parent=1 // pred_region
      _
    $region21: #{tpu_custom_call.1} parent=1 // pred_fallthru
      _
    %755 = vsyncpa [#allocation3], 1

</llo_original>
